<compile_context>
chip_gen: v6e
topology: v6e:2x2x1
jax: 0.10.0
libtpu: 0.0.40
codegen_flags: <defaults>
</compile_context>

<pallas_src>
import functools

import jax
import jax.numpy as jnp
from jax.experimental import pallas as pl
from jax.experimental.pallas import tpu as pltpu


def _lambda_shortcut_kernel(sel_ref, x_ref, o_ref, *, pad):
    """sel_ref: (W, Wo); x_ref: (Bt, C, H, W); o_ref: (Bt, C + 2*pad, Ho, Wo)."""
    Bt, C, H, W = x_ref.shape
    _, Cout, Ho, Wo = o_ref.shape
    dtype = o_ref.dtype

    # Zero only the two channel-pad slabs (disjoint from the data band, so no
    # output element is stored twice).  `pad` is a static Python int.
    if pad > 0:
        zeros = jnp.zeros((Bt, pad, Ho, Wo), dtype)
        o_ref[:, :pad] = zeros
        o_ref[:, pad + C:] = zeros

    # Even rows via a strided sublane read (skips odd rows at the VMEM load),
    # even columns via a single 0/1-selection matmul over the whole
    # (Bt*C*Ho, W) slab -> one MXU op and one store for the data band.
    x_even = x_ref[:, :, pl.ds(0, Ho, stride=2), :]          # (Bt, C, Ho, W)
    flat = x_even.reshape(Bt * C * Ho, W)                    # lane dim unchanged
    y = jnp.dot(flat, sel_ref[...],
                precision=jax.lax.Precision.HIGHEST,
                preferred_element_type=jnp.float32)          # (Bt*C*Ho, Wo)
    o_ref[:, pad:pad + C] = y.reshape(Bt, C, Ho, Wo).astype(dtype)


def _round_up(x, m):
    return (x + m - 1) // m * m


def _pick_batch_tile(B, C, H, W, Cout, Ho, Wo, itemsize):
    """Largest Bt dividing B whose in+out VMEM tiles stay around ~4 MiB."""
    per_image = (C * _round_up(H, 8) * _round_up(W, 128)
                 + Cout * _round_up(Ho, 8) * _round_up(Wo, 128)) * itemsize
    target = 4 * 1024 * 1024
    bt = max(1, min(B, target // max(per_image, 1)))
    if bt >= B and B > 1:        # keep >= 2 grid steps so v7x can split them
        bt = B // 2
    while B % bt:
        bt -= 1
    return bt


def lambda_layer(x_nchw: jax.Array, planes: int) -> jax.Array:
    """Pallas equivalent of
    LambdaLayer(lambda x: F.pad(x[:, :, ::2, ::2], (0,0,0,0,planes//4,planes//4)))
    applied to an NCHW input; returns NCHW output."""
    B, C, H, W = x_nchw.shape
    pad = planes // 4
    Ho = -(-H // 2)              # ceil(H/2), matches x[:, :, ::2, ::2]
    Wo = -(-W // 2)
    Cout = C + 2 * pad
    dtype = x_nchw.dtype
    itemsize = jnp.dtype(dtype).itemsize

    Bt = _pick_batch_tile(B, C, H, W, Cout, Ho, Wo, itemsize)

    # 0/1 column-selection matrix: sel[w, wo] = (w == 2*wo).  One nonzero per
    # output column, so the matmul is an exact gather of even columns.
    sel = (jnp.arange(W)[:, None] == 2 * jnp.arange(Wo)[None, :]).astype(dtype)

    kernel = functools.partial(_lambda_shortcut_kernel, pad=pad)

    return pl.pallas_call(
        kernel,
        out_shape=jax.ShapeDtypeStruct((B, Cout, Ho, Wo), dtype),
        grid=(B // Bt,),
        in_specs=[
            pl.BlockSpec((W, Wo), lambda b: (0, 0)),              # resident sel
            pl.BlockSpec((Bt, C, H, W), lambda b: (b, 0, 0, 0)),
        ],
        out_specs=pl.BlockSpec((Bt, Cout, Ho, Wo), lambda b: (b, 0, 0, 0)),
        compiler_params=pltpu.CompilerParams(
            dimension_semantics=("parallel",),
            vmem_limit_bytes=48 * 1024 * 1024,
        ),
    )(sel, x_nchw)


if __name__ == "__main__":
    key = jax.random.PRNGKey(0)
    k0, k1 = jax.random.split(key)

    def reference(x, planes):
        p = planes // 4
        return jnp.pad(x[:, :, ::2, ::2], ((0, 0), (p, p), (0, 0), (0, 0)))

    # Small shapes consistent with the ResNet shortcut use of LambdaLayer.
    B, C, H, W = 2, 4, 16, 16
    planes = 8                                   # next-stage width (2 * in_planes)
    x = jax.random.normal(k0, (B, C, H, W), dtype=jnp.float32)

    out = jax.block_until_ready(lambda_layer(x, planes))
    ref = reference(x, planes)
    assert out.shape == ref.shape, (out.shape, ref.shape)
    assert jnp.allclose(out, ref, atol=1e-6), "mismatch vs reference (16x16)"

    # Second small check: lane-wide spatial (W = 128) exercises dense lane stores.
    x2 = jax.random.normal(k1, (2, 4, 16, 128), dtype=jnp.float32)
    out2 = jax.block_until_ready(lambda_layer(x2, planes))
    ref2 = reference(x2, planes)
    assert out2.shape == ref2.shape, (out2.shape, ref2.shape)
    assert jnp.allclose(out2, ref2, atol=1e-6), "mismatch vs reference (16x128)"

    print("KERNEL_OK")
</pallas_src>

<mosaic_0001>
module attributes {stable_mosaic.version = 11 : i64} {
  func.func @_lambda_shortcut_kernel(%arg0: i32, %arg1: memref<16x8xf32, #tpu.memory_space<vmem>>, %arg2: memref<1x4x16x16xf32, #tpu.memory_space<vmem>>, %arg3: memref<1x8x8x8xf32, #tpu.memory_space<vmem>>) attributes {dimension_semantics = [#tpu.dimension_semantics<parallel>], iteration_bounds = array<i64: 2>, scalar_prefetch = 0 : i64, scratch_operands = 0 : i64, tpu.core_type = #tpu.core_type<tc>, window_params = [{pipeline_mode = #tpu.pipeline_mode<synchronous>, transform_indices = @transform_0, window_bounds = array<i64: 16, 8>}, {transform_indices = @transform_1, window_bounds = array<i64: 1, 4, 16, 16>}, {transform_indices = @transform_2, window_bounds = array<i64: 1, 8, 8, 8>}]} {
    %cst = arith.constant 0.000000e+00 : f32
    %0 = vector.broadcast %cst : f32 to vector<1x2x8x8xf32>
    %c0 = arith.constant 0 : index
    %c0_0 = arith.constant 0 : index
    %c0_1 = arith.constant 0 : index
    %c0_2 = arith.constant 0 : index
    %1 = vector.load %arg3[%c0, %c0_0, %c0_1, %c0_2] : memref<1x8x8x8xf32, #tpu.memory_space<vmem>>, vector<1x2x8x8xf32>
    tpu.vector_store %arg3[%c0, %c0_0, %c0_1, %c0_2], %0 {strides = array<i32>} : memref<1x8x8x8xf32, #tpu.memory_space<vmem>>, vector<1x2x8x8xf32>,
    %c0_3 = arith.constant 0 : index
    %c6 = arith.constant 6 : index
    %c0_4 = arith.constant 0 : index
    %c0_5 = arith.constant 0 : index
    %2 = vector.load %arg3[%c0_3, %c6, %c0_4, %c0_5] : memref<1x8x8x8xf32, #tpu.memory_space<vmem>>, vector<1x2x8x8xf32>
    tpu.vector_store %arg3[%c0_3, %c6, %c0_4, %c0_5], %0 {strides = array<i32>} : memref<1x8x8x8xf32, #tpu.memory_space<vmem>>, vector<1x2x8x8xf32>,
    %c0_6 = arith.constant 0 : index
    %c0_7 = arith.constant 0 : index
    %c0_8 = arith.constant 0 : index
    %c0_9 = arith.constant 0 : index
    %3 = tpu.strided_load %arg2[%c0_6, %c0_7, %c0_8, %c0_9] {strides = array<i32: 1, 1, 2, 1>} : memref<1x4x16x16xf32, #tpu.memory_space<vmem>>, vector<1x4x8x16xf32>
    %4 = vector.shape_cast %3 : vector<1x4x8x16xf32> to vector<32x16xf32>
    %c0_10 = arith.constant 0 : index
    %c0_11 = arith.constant 0 : index
    %5 = vector.load %arg1[%c0_10, %c0_11] : memref<16x8xf32, #tpu.memory_space<vmem>>, vector<16x8xf32>
    %cst_12 = arith.constant dense<0.000000e+00> : vector<32x8xf32>
    %6 = tpu.matmul %4, %5, %cst_12 {dimension_numbers = #tpu.dot_dimension_numbers<[1], [0], [0], [1], [0, 0, 1, 1], [], []>, precision = #tpu.contract_precision<fp32>} : vector<32x16xf32>, vector<16x8xf32>, vector<32x8xf32> -> vector<32x8xf32>
    %7 = vector.shape_cast %6 : vector<32x8xf32> to vector<1x4x8x8xf32>
    %c0_13 = arith.constant 0 : index
    %c2 = arith.constant 2 : index
    %c0_14 = arith.constant 0 : index
    %c0_15 = arith.constant 0 : index
    %8 = vector.load %arg3[%c0_13, %c2, %c0_14, %c0_15] : memref<1x8x8x8xf32, #tpu.memory_space<vmem>>, vector<1x4x8x8xf32>
    tpu.vector_store %arg3[%c0_13, %c2, %c0_14, %c0_15], %7 {strides = array<i32>} : memref<1x8x8x8xf32, #tpu.memory_space<vmem>>, vector<1x4x8x8xf32>,
    return
  }
  func.func @transform_0(%arg0: i32) -> (i32, i32) {
    %c0_i32 = arith.constant 0 : i32
    %c0_i32_0 = arith.constant 0 : i32
    %c0_i32_1 = arith.constant 0 : i32
    return %c0_i32, %c0_i32_0 : i32, i32
  }
  func.func @transform_1(%arg0: i32) -> (i32, i32, i32, i32) {
    %c0_i32 = arith.constant 0 : i32
    %c0_i32_0 = arith.constant 0 : i32
    %c0_i32_1 = arith.constant 0 : i32
    %c0_i32_2 = arith.constant 0 : i32
    return %arg0, %c0_i32, %c0_i32_0, %c0_i32_1 : i32, i32, i32, i32
  }
  func.func @transform_2(%arg0: i32) -> (i32, i32, i32, i32) {
    %c0_i32 = arith.constant 0 : i32
    %c0_i32_0 = arith.constant 0 : i32
    %c0_i32_1 = arith.constant 0 : i32
    %c0_i32_2 = arith.constant 0 : i32
    return %arg0, %c0_i32, %c0_i32_0, %c0_i32_1 : i32, i32, i32, i32
  }
}

</mosaic_0001>

<llo_original>
// kernel: tpu_custom_call.1
$region0: #{tpu_custom_call.1}
  #allocation0 [shape = 'u32[]', space=smem, size = 0x4, offset = 0x4, fixed_abs, tag = 'smem constant byte address 0x4 - core index']
  #allocation1 [shape = 'u32[144,128]{1,0:T(1,128)}', space=vmem, size = 0x12000, scoped, tag = 'internal scratch']
  %s0 = inlined_call_operand.vmem [shape: f32[16,8], index: 0, kind: input, shape index: {}]
  %s1 = inlined_call_operand.hbm [shape: f32[2,4,16,16], index: 1, kind: input, shape index: {}]
  %s2 = inlined_call_operand.hbm [shape: f32[2,8,8,8], index: 2, kind: output, shape index: {}]
  %s3 = sld [smem:[#allocation0]]
  $region45: #{tpu_custom_call.1} parent=0
    _
  %s5 = ssub.s32 1, %s3
  %s6 = scalar_select 0, %s5, %s3
  $region1: #{tpu_custom_call.1} parent=0
    #allocation2 [shape = 'u8[65536]{0}', space=vmem, size = 0x10000, scoped, tag = 'input window, operand 1']
    #allocation3 [shape = 's32[2]{0}', space=sflag, size = 0x8, scoped, tag = 'scoped memory for tpu_custom_call.1']
    #allocation4 [shape = 's32[2]{0}', space=sflag, size = 0x8, scoped, tag = 'scoped memory for tpu_custom_call.1']
    #allocation5 [shape = 'u8[65536]{0}', space=vmem, size = 0x10000, scoped, tag = 'output window, operand 0']
    %7 = vsyncpa [#allocation3], 0
    %s8 = scalar_lea.sflag [#allocation3], 1
    %9 = vsyncpa %s8, 0
    %10 = vsyncpa [#allocation4], 0
    %s11 = scalar_lea.sflag [#allocation4], 1
    %12 = vsyncpa %s11, 0
    loop: start=0, step=1, limit=4
    $region2: #{tpu_custom_call.1} parent=1 // loop_pre_header
      _
    $region3: #{tpu_custom_call.1} parent=1 // loop_header
      %s14 = sphi 0, %s18
      %p15 = scmp.ge.s32.totalorder %s14, 4
      %s22 = sphi 0, %s22
      %s24 = sphi 0, %s22
      %s25 = sphi 0, %s24
      %s39 = sphi 0, %s25
      %s45 = sphi 0, %s47
      %s48 = sphi 0, %s45
      %s49 = sphi 0, %s48
      %s65 = sphi 0, %s49
      %s71 = sphi 0, %s73
      %s74 = sphi 0, %s71
      %s75 = sphi 0, %s74
      %s91 = sphi 0, %s75
    $region4: #{tpu_custom_call.1} parent=1 // loop_header_branch
      %17 = sbr.rel (%p15) target = $region8
    $region5: #{tpu_custom_call.1} parent=1 // loop_body
      %s19 = ssub.s32 %s14, 1
      %s20 = ssub.s32 %s14, 2
      %s21 = sadd.s32 %s14, 1
      %s23 = sadd.s32 %s22, 1
      %p26 = scmp.eq.s32.totalorder %s14, 1
      %p27 = scmp.ne.s32.totalorder %s22, %s24
      %p28 = scmp.eq.s32.totalorder %s14, 0
      %p29 = por %p27, %p28
      %p30 = scmp.ne.s32.totalorder %s22, %s24
      %p31 = scmp.eq.s32.totalorder %s19, 1
      %p32 = por %p30, %p31
      %p33 = scmp.ne.s32.totalorder %s24, %s25
      %p34 = scmp.eq.s32.totalorder %s19, 0
      %p35 = por %p33, %p34
      %p36 = scmp.ne.s32.totalorder %s24, %s25
      %p37 = scmp.eq.s32.totalorder %s20, 1
      %p38 = por %p36, %p37
      %p40 = scmp.ne.s32.totalorder %s25, %s39
      %p41 = scmp.eq.s32.totalorder %s20, 0
      %p42 = por %p40, %p41
      %s43 = ssub.s32 %s14, %s21
      %p44 = scmp.eq.s32.totalorder %s43, 0
      %s46 = sadd.s32 %s45, 1
      %s47 = scalar_select %p44, %s45, %s46
      %p50 = pneg %p44
      %p51 = scmp.eq.s32.totalorder %s14, 1
      %p52 = por %p50, %p51
      %p53 = scmp.ne.s32.totalorder %s45, %s48
      %p54 = scmp.eq.s32.totalorder %s14, 0
      %p55 = por %p53, %p54
      %p56 = scmp.ne.s32.totalorder %s45, %s48
      %p57 = scmp.eq.s32.totalorder %s19, 1
      %p58 = por %p56, %p57
      %p59 = scmp.ne.s32.totalorder %s48, %s49
      %p60 = scmp.eq.s32.totalorder %s19, 0
      %p61 = por %p59, %p60
      %p62 = scmp.ne.s32.totalorder %s48, %s49
      %p63 = scmp.eq.s32.totalorder %s20, 1
      %p64 = por %p62, %p63
      %p66 = scmp.ne.s32.totalorder %s49, %s65
      %p67 = scmp.eq.s32.totalorder %s20, 0
      %p68 = por %p66, %p67
      %s69 = ssub.s32 %s14, %s21
      %p70 = scmp.eq.s32.totalorder %s69, 0
      %s72 = sadd.s32 %s71, 1
      %s73 = scalar_select %p70, %s71, %s72
      %p76 = pneg %p70
      %p77 = scmp.eq.s32.totalorder %s14, 1
      %p78 = por %p76, %p77
      %p79 = scmp.ne.s32.totalorder %s71, %s74
      %p80 = scmp.eq.s32.totalorder %s14, 0
      %p81 = por %p79, %p80
      %p82 = scmp.ne.s32.totalorder %s71, %s74
      %p83 = scmp.eq.s32.totalorder %s19, 1
      %p84 = por %p82, %p83
      %p85 = scmp.ne.s32.totalorder %s74, %s75
      %p86 = scmp.eq.s32.totalorder %s19, 0
      %p87 = por %p85, %p86
      %p88 = scmp.ne.s32.totalorder %s74, %s75
      %p89 = scmp.eq.s32.totalorder %s20, 1
      %p90 = por %p88, %p89
      %p92 = scmp.ne.s32.totalorder %s75, %s91
      %p93 = scmp.eq.s32.totalorder %s20, 0
      %p94 = por %p92, %p93
      %p95 = scmp.le.s32.totalorder 1, %s14
      %p96 = scmp.lt.s32.totalorder %s14, 3
      %p97 = pnand %p95, %p96
      %p98 = pneg %p97
      // Predicated region
      $region9: #{tpu_custom_call.1} parent=5 // pred_check
        _
      $region10: #{tpu_custom_call.1} parent=5 // pred_check_branch
        %100 = sbr.rel (%p97) target = $region12
      $region11: #{tpu_custom_call.1} parent=5 // pred_region
        %s101 = ssub.s32 %s14, 1
        // Predicated region
        $region13: #{tpu_custom_call.1} parent=11 // pred_check
          %p102 = pneg %p35
        $region14: #{tpu_custom_call.1} parent=11 // pred_check_branch
          %104 = sbr.rel (%p102) target = $region16
        $region15: #{tpu_custom_call.1} parent=11 // pred_region
          _
        $region16: #{tpu_custom_call.1} parent=11 // pred_fallthru
          _
      $region12: #{tpu_custom_call.1} parent=5 // pred_fallthru
        _
      %p105 = scmp.lt.s32.totalorder %s14, 2
      // Predicated region
      $region17: #{tpu_custom_call.1} parent=5 // pred_check
        %p106 = pneg %p105
      $region18: #{tpu_custom_call.1} parent=5 // pred_check_branch
        %108 = sbr.rel (%p106) target = $region20
      $region19: #{tpu_custom_call.1} parent=5 // pred_region
        // Predicated region
        $region21: #{tpu_custom_call.1} parent=19 // pred_check
          %p109 = pneg %p55
        $region22: #{tpu_custom_call.1} parent=19 // pred_check_branch
          %111 = sbr.rel (%p109) target = $region24
        $region23: #{tpu_custom_call.1} parent=19 // pred_region
          %s112 = sand.u32 %s45, 1
          %s113 = scalar_lea.sflag [#allocation3], %s112
          %s114 = sand.u32 %s45, 1
          %s115 = smul.addr %s114, 64
          %s116 = scalar_lea.vmem [#allocation2], %s115
          %s118 = ssub.s32 1024, 1024
          %119 = vsyncadd %s113, %s118
          %s120 = smul.addr %s14, 8
          %s121 = smul.addr %s120, 128
          %s122 = scalar_lea.hbm %s1, %s121
          %s123 = sshll.u32 %s116, 4
          %s124 = int_to_ptr.vmem [resolvable:$true] %s123
          %129 = dma.hbm_to_vmem [thread:$0]  %s122, 1024, %s124, %s113, 128, 128, 8
        $region24: #{tpu_custom_call.1} parent=19 // pred_fallthru
          _
      $region20: #{tpu_custom_call.1} parent=5 // pred_fallthru
        _
      %p130 = scmp.le.s32.totalorder 1, %s14
      %p131 = scmp.lt.s32.totalorder %s14, 3
      %p132 = pnand %p130, %p131
      %p133 = pneg %p132
      // Predicated region
      $region25: #{tpu_custom_call.1} parent=5 // pred_check
        _
      $region26: #{tpu_custom_call.1} parent=5 // pred_check_branch
        %135 = sbr.rel (%p132) target = $region28
      $region27: #{tpu_custom_call.1} parent=5 // pred_region
        %s136 = ssub.s32 %s14, 1
        %s137 = sand.u32 %s48, 1
        %s138 = scalar_lea.sflag [#allocation3], %s137
        %s139 = sand.u32 %s48, 1
        %s140 = smul.addr %s139, 64
        %s141 = scalar_lea.vmem [#allocation2], %s140
        // Predicated region
        $region29: #{tpu_custom_call.1} parent=27 // pred_check
          %p142 = pneg %p61
        $region30: #{tpu_custom_call.1} parent=27 // pred_check_branch
          %144 = sbr.rel (%p142) target = $region32
        $region31: #{tpu_custom_call.1} parent=27 // pred_region
          %145 = dma.done %s138, 1024
        $region32: #{tpu_custom_call.1} parent=27 // pred_fallthru
          _
        %p146 = pneg %p35
        %p147 = pneg %p32
        %s148 = sand.u32 %s48, 1
        %s149 = scalar_lea.sflag [#allocation3], %s148
        %s150 = sand.u32 %s48, 1
        %s151 = smul.addr %s150, 64
        %s152 = scalar_lea.vmem [#allocation2], %s151
        %p153 = pneg %p61
        %p154 = pneg %p58
        %p155 = pneg %p87
        %p156 = pneg %p84
        %s157 = sand.u32 %s74, 1
        %s158 = scalar_lea.sflag [#allocation4], %s157
        %s159 = sand.u32 %s74, 1
        %s160 = smul.addr %s159, 64
        %s161 = scalar_lea.vmem [#allocation5], %s160
        %vm162 = vcmask 64512
        %163 = vst.msk [vmem:[%s161] sm:$0xff] %vm162, 0.0
        %164 = vst.msk [vmem:[%s161 + $0x8] sm:$0xff] %vm162, 0.0
        %s165 = scalar_lea.vmem %s161, 48 [#allocation5]
        %166 = vst.msk [vmem:[%s165] sm:$0xff] %vm162, 0.0
        %167 = vst.msk [vmem:[%s165 + $0x8] sm:$0xff] %vm162, 0.0
        %v168 = vld [vmem:[%s141] ss:$2 sm:$0xff]
        %s169 = scalar_lea.vmem %s141, 16 [#allocation2]
        %v170 = vld [vmem:[%s169] ss:$2 sm:$0xff]
        %s171 = scalar_lea.vmem %s141, 32 [#allocation2]
        %v172 = vld [vmem:[%s171] ss:$2 sm:$0xff]
        %s173 = scalar_lea.vmem %s141, 48 [#allocation2]
        %v174 = vld [vmem:[%s173] ss:$2 sm:$0xff]
        %v175 = vld [vmem:[%s0] sm:$0xff]
        %v176 = vld [vmem:[%s0 + $0x8] sm:$0xff]
        %vm177 = vcmask 130048
        %v179 = vsel %vm177, %v168, 0
        %v182 = vsel %vm177, %v170, 0
        %v185 = vsel %vm177, %v172, 0
        %v188 = vsel %vm177, %v174, 0
        %190 = vmatprep.subr.mxu0 0.0
        %191 = vmatpush1.msra.mxu0 0.0
        %192 = vmatprep.subr.mxu0 0.0
        %193 = vmatpush1.msra.mxu0 0.0
        %194 = vmatprep.subr.mxu0 0.0
        %195 = vmatpush1.msra.mxu0 0.0
        %196 = vmatprep.subr.mxu0 0.0
        %197 = vmatpush1.msra.mxu0 0.0
        %198 = vmatprep.subr.mxu0 0.0
        %199 = vmatpush1.msra.mxu0 0.0
        %200 = vmatprep.subr.mxu0 0.0
        %201 = vmatpush1.msra.mxu0 0.0
        %202 = vmatprep.subr.mxu0 0.0
        %203 = vmatpush1.msra.mxu0 0.0
        %204 = vmatprep.subr.mxu0 0.0
        %205 = vmatpush1.msra.mxu0 0.0
        %206 = vmatprep.subr.mxu0 0.0
        %207 = vmatpush1.msra.mxu0 0.0
        %208 = vmatprep.subr.mxu0 0.0
        %209 = vmatpush1.msra.mxu0 0.0
        %210 = vmatprep.subr.mxu0 0.0
        %211 = vmatpush1.msra.mxu0 0.0
        %212 = vmatprep.subr.mxu0 0.0
        %213 = vmatpush1.msra.mxu0 0.0
        %214 = vmatprep.subr.mxu0 0.0
        %215 = vmatpush1.msra.mxu0 0.0
        %216 = vmatprep.subr.mxu0 0.0
        %217 = vmatpush1.msra.mxu0 0.0
        %218 = vmatprep.subr.mxu0 0.0
        %v219 = vand.u32 %v176, 4294901760
        %220 = vmatpush1.msra.mxu0 %v219
        %221 = vmatprep.subr.mxu0 0.0
        %v222 = vand.u32 %v175, 4294901760
        %223 = vmatpush1.msra.mxu0 %v222
        %224 = vmatprep.subr.mxu0 0.0
        %225 = vmatpush2.msra.mxu0 0.0
        %226 = vmatprep.subr.mxu0 0.0
        %227 = vmatpush2.msra.mxu0 0.0
        %228 = vmatprep.subr.mxu0 0.0
        %229 = vmatpush2.msra.mxu0 0.0
        %230 = vmatprep.subr.mxu0 0.0
        %231 = vmatpush2.msra.mxu0 0.0
        %232 = vmatprep.subr.mxu0 0.0
        %233 = vmatpush2.msra.mxu0 0.0
        %234 = vmatprep.subr.mxu0 0.0
        %235 = vmatpush2.msra.mxu0 0.0
        %236 = vmatprep.subr.mxu0 0.0
        %237 = vmatpush2.msra.mxu0 0.0
        %238 = vmatprep.subr.mxu0 0.0
        %239 = vmatpush2.msra.mxu0 0.0
        %240 = vmatprep.subr.mxu0 0.0
        %241 = vmatpush2.msra.mxu0 0.0
        %242 = vmatprep.subr.mxu0 0.0
        %243 = vmatpush2.msra.mxu0 0.0
        %244 = vmatprep.subr.mxu0 0.0
        %245 = vmatpush2.msra.mxu0 0.0
        %246 = vmatprep.subr.mxu0 0.0
        %247 = vmatpush2.msra.mxu0 0.0
        %248 = vmatprep.subr.mxu0 0.0
        %249 = vmatpush2.msra.mxu0 0.0
        %250 = vmatprep.subr.mxu0 0.0
        %251 = vmatpush2.msra.mxu0 0.0
        %252 = vmatprep.subr.mxu0 0.0
        %253 = vmatpush2.msra.mxu0 0.0
        %254 = vmatprep.subr.mxu0 0.0
        %255 = vmatpush2.msra.mxu0 0.0
        %256 = vmatprep.mubr.f32.mxu0 0.0
        %v257 = vand.u32 %v179, 4294901760
        %v258 = vsub.f32 %v179, %v257
        %v259 = vand.u32 %v258, 4294901760
        %v260 = vsub.f32 %v258, %v259
        %v261 = vand.u32 %v260, 4294901760
        %262 = vmatmul.mubr.f32.gmra.mxu0 %v261
        %v263 = vpop.f32.mrf.mxu0
        %v264 = vadd.f32 0.0, %v263
        %v265 = vpop.f32.mrf.mxu0
        %266 = vmatprep.mubr.f32.mxu0 0.0
        %v267 = vand.u32 %v182, 4294901760
        %v268 = vsub.f32 %v182, %v267
        %v269 = vand.u32 %v268, 4294901760
        %v270 = vsub.f32 %v268, %v269
        %v271 = vand.u32 %v270, 4294901760
        %272 = vmatmul.mubr.f32.gmra.mxu0 %v271
        %v273 = vpop.f32.mrf.mxu0
        %v274 = vadd.f32 0.0, %v273
        %v275 = vpop.f32.mrf.mxu0
        %276 = vmatprep.mubr.f32.mxu0 0.0
        %v277 = vand.u32 %v185, 4294901760
        %v278 = vsub.f32 %v185, %v277
        %v279 = vand.u32 %v278, 4294901760
        %v280 = vsub.f32 %v278, %v279
        %v281 = vand.u32 %v280, 4294901760
        %282 = vmatmul.mubr.f32.gmra.mxu0 %v281
        %v283 = vpop.f32.mrf.mxu0
        %v284 = vadd.f32 0.0, %v283
        %v285 = vpop.f32.mrf.mxu0
        %286 = vmatprep.mubr.f32.mxu0 0.0
        %v287 = vand.u32 %v188, 4294901760
        %v288 = vsub.f32 %v188, %v287
        %v289 = vand.u32 %v288, 4294901760
        %v290 = vsub.f32 %v288, %v289
        %v291 = vand.u32 %v290, 4294901760
        %292 = vmatmul.mubr.f32.gmra.mxu0 %v291
        %v293 = vpop.f32.mrf.mxu0
        %v294 = vadd.f32 0.0, %v293
        %v295 = vpop.f32.mrf.mxu0
        %296 = vdwg.mxu0
        %297 = vmatprep.subr.mxu0 0.0
        %298 = vmatpush1.msra.mxu0 0.0
        %299 = vmatprep.subr.mxu0 0.0
        %300 = vmatpush1.msra.mxu0 0.0
        %301 = vmatprep.subr.mxu0 0.0
        %302 = vmatpush1.msra.mxu0 0.0
        %303 = vmatprep.subr.mxu0 0.0
        %304 = vmatpush1.msra.mxu0 0.0
        %305 = vmatprep.subr.mxu0 0.0
        %306 = vmatpush1.msra.mxu0 0.0
        %307 = vmatprep.subr.mxu0 0.0
        %308 = vmatpush1.msra.mxu0 0.0
        %309 = vmatprep.subr.mxu0 0.0
        %310 = vmatpush1.msra.mxu0 0.0
        %311 = vmatprep.subr.mxu0 0.0
        %312 = vmatpush1.msra.mxu0 0.0
        %313 = vmatprep.subr.mxu0 0.0
        %314 = vmatpush1.msra.mxu0 0.0
        %315 = vmatprep.subr.mxu0 0.0
        %316 = vmatpush1.msra.mxu0 0.0
        %317 = vmatprep.subr.mxu0 0.0
        %318 = vmatpush1.msra.mxu0 0.0
        %319 = vmatprep.subr.mxu0 0.0
        %320 = vmatpush1.msra.mxu0 0.0
        %321 = vmatprep.subr.mxu0 0.0
        %322 = vmatpush1.msra.mxu0 0.0
        %323 = vmatprep.subr.mxu0 0.0
        %324 = vmatpush1.msra.mxu0 0.0
        %325 = vmatprep.subr.mxu0 0.0
        %v326 = vand.u32 %v176, 4294901760
        %v327 = vsub.f32 %v176, %v326
        %v328 = vand.u32 %v327, 4294901760
        %v329 = vsub.f32 %v327, %v328
        %v330 = vand.u32 %v329, 4294901760
        %331 = vmatpush1.msra.mxu0 %v330
        %332 = vmatprep.subr.mxu0 0.0
        %v333 = vand.u32 %v175, 4294901760
        %v334 = vsub.f32 %v175, %v333
        %v335 = vand.u32 %v334, 4294901760
        %v336 = vsub.f32 %v334, %v335
        %v337 = vand.u32 %v336, 4294901760
        %338 = vmatpush1.msra.mxu0 %v337
        %339 = vmatprep.subr.mxu0 0.0
        %340 = vmatpush2.msra.mxu0 0.0
        %341 = vmatprep.subr.mxu0 0.0
        %342 = vmatpush2.msra.mxu0 0.0
        %343 = vmatprep.subr.mxu0 0.0
        %344 = vmatpush2.msra.mxu0 0.0
        %345 = vmatprep.subr.mxu0 0.0
        %346 = vmatpush2.msra.mxu0 0.0
        %347 = vmatprep.subr.mxu0 0.0
        %348 = vmatpush2.msra.mxu0 0.0
        %349 = vmatprep.subr.mxu0 0.0
        %350 = vmatpush2.msra.mxu0 0.0
        %351 = vmatprep.subr.mxu0 0.0
        %352 = vmatpush2.msra.mxu0 0.0
        %353 = vmatprep.subr.mxu0 0.0
        %354 = vmatpush2.msra.mxu0 0.0
        %355 = vmatprep.subr.mxu0 0.0
        %356 = vmatpush2.msra.mxu0 0.0
        %357 = vmatprep.subr.mxu0 0.0
        %358 = vmatpush2.msra.mxu0 0.0
        %359 = vmatprep.subr.mxu0 0.0
        %360 = vmatpush2.msra.mxu0 0.0
        %361 = vmatprep.subr.mxu0 0.0
        %362 = vmatpush2.msra.mxu0 0.0
        %363 = vmatprep.subr.mxu0 0.0
        %364 = vmatpush2.msra.mxu0 0.0
        %365 = vmatprep.subr.mxu0 0.0
        %366 = vmatpush2.msra.mxu0 0.0
        %367 = vmatprep.subr.mxu0 0.0
        %368 = vmatpush2.msra.mxu0 0.0
        %369 = vmatprep.subr.mxu0 0.0
        %370 = vmatpush2.msra.mxu0 0.0
        %371 = vmatprep.mubr.f32.mxu0 0.0
        %v372 = vand.u32 %v179, 4294901760
        %373 = vmatmul.mubr.f32.gmra.mxu0 %v372
        %v374 = vpop.f32.mrf.mxu0
        %v375 = vadd.f32 %v264, %v374
        %v376 = vpop.f32.mrf.mxu0
        %377 = vmatprep.mubr.f32.mxu0 0.0
        %v378 = vand.u32 %v182, 4294901760
        %379 = vmatmul.mubr.f32.gmra.mxu0 %v378
        %v380 = vpop.f32.mrf.mxu0
        %v381 = vadd.f32 %v274, %v380
        %v382 = vpop.f32.mrf.mxu0
        %383 = vmatprep.mubr.f32.mxu0 0.0
        %v384 = vand.u32 %v185, 4294901760
        %385 = vmatmul.mubr.f32.gmra.mxu0 %v384
        %v386 = vpop.f32.mrf.mxu0
        %v387 = vadd.f32 %v284, %v386
        %v388 = vpop.f32.mrf.mxu0
        %389 = vmatprep.mubr.f32.mxu0 0.0
        %v390 = vand.u32 %v188, 4294901760
        %391 = vmatmul.mubr.f32.gmra.mxu0 %v390
        %v392 = vpop.f32.mrf.mxu0
        %v393 = vadd.f32 %v294, %v392
        %v394 = vpop.f32.mrf.mxu0
        %395 = vdwg.mxu0
        %396 = vmatprep.subr.mxu0 0.0
        %397 = vmatpush1.msra.mxu0 0.0
        %398 = vmatprep.subr.mxu0 0.0
        %399 = vmatpush1.msra.mxu0 0.0
        %400 = vmatprep.subr.mxu0 0.0
        %401 = vmatpush1.msra.mxu0 0.0
        %402 = vmatprep.subr.mxu0 0.0
        %403 = vmatpush1.msra.mxu0 0.0
        %404 = vmatprep.subr.mxu0 0.0
        %405 = vmatpush1.msra.mxu0 0.0
        %406 = vmatprep.subr.mxu0 0.0
        %407 = vmatpush1.msra.mxu0 0.0
        %408 = vmatprep.subr.mxu0 0.0
        %409 = vmatpush1.msra.mxu0 0.0
        %410 = vmatprep.subr.mxu0 0.0
        %411 = vmatpush1.msra.mxu0 0.0
        %412 = vmatprep.subr.mxu0 0.0
        %413 = vmatpush1.msra.mxu0 0.0
        %414 = vmatprep.subr.mxu0 0.0
        %415 = vmatpush1.msra.mxu0 0.0
        %416 = vmatprep.subr.mxu0 0.0
        %417 = vmatpush1.msra.mxu0 0.0
        %418 = vmatprep.subr.mxu0 0.0
        %419 = vmatpush1.msra.mxu0 0.0
        %420 = vmatprep.subr.mxu0 0.0
        %421 = vmatpush1.msra.mxu0 0.0
        %422 = vmatprep.subr.mxu0 0.0
        %423 = vmatpush1.msra.mxu0 0.0
        %424 = vmatprep.subr.mxu0 0.0
        %v425 = vand.u32 %v176, 4294901760
        %v426 = vsub.f32 %v176, %v425
        %427 = vmatpush1.msra.mxu0 %v426
        %428 = vmatprep.subr.mxu0 0.0
        %v429 = vand.u32 %v175, 4294901760
        %v430 = vsub.f32 %v175, %v429
        %431 = vmatpush1.msra.mxu0 %v430
        %432 = vmatprep.subr.mxu0 0.0
        %433 = vmatpush2.msra.mxu0 0.0
        %434 = vmatprep.subr.mxu0 0.0
        %435 = vmatpush2.msra.mxu0 0.0
        %436 = vmatprep.subr.mxu0 0.0
        %437 = vmatpush2.msra.mxu0 0.0
        %438 = vmatprep.subr.mxu0 0.0
        %439 = vmatpush2.msra.mxu0 0.0
        %440 = vmatprep.subr.mxu0 0.0
        %441 = vmatpush2.msra.mxu0 0.0
        %442 = vmatprep.subr.mxu0 0.0
        %443 = vmatpush2.msra.mxu0 0.0
        %444 = vmatprep.subr.mxu0 0.0
        %445 = vmatpush2.msra.mxu0 0.0
        %446 = vmatprep.subr.mxu0 0.0
        %447 = vmatpush2.msra.mxu0 0.0
        %448 = vmatprep.subr.mxu0 0.0
        %449 = vmatpush2.msra.mxu0 0.0
        %450 = vmatprep.subr.mxu0 0.0
        %451 = vmatpush2.msra.mxu0 0.0
        %452 = vmatprep.subr.mxu0 0.0
        %453 = vmatpush2.msra.mxu0 0.0
        %454 = vmatprep.subr.mxu0 0.0
        %455 = vmatpush2.msra.mxu0 0.0
        %456 = vmatprep.subr.mxu0 0.0
        %457 = vmatpush2.msra.mxu0 0.0
        %458 = vmatprep.subr.mxu0 0.0
        %459 = vmatpush2.msra.mxu0 0.0
        %460 = vmatprep.subr.mxu0 0.0
        %461 = vmatpush2.msra.mxu0 0.0
        %462 = vmatprep.subr.mxu0 0.0
        %463 = vmatpush2.msra.mxu0 0.0
        %464 = vmatprep.mubr.f32.mxu0 0.0
        %v465 = vand.u32 %v179, 4294901760
        %v466 = vsub.f32 %v179, %v465
        %467 = vmatmul.mubr.f32.gmra.mxu0 %v466
        %v468 = vpop.f32.mrf.mxu0
        %v469 = vadd.f32 %v375, %v468
        %v470 = vpop.f32.mrf.mxu0
        %471 = vmatprep.mubr.f32.mxu0 0.0
        %v472 = vand.u32 %v182, 4294901760
        %v473 = vsub.f32 %v182, %v472
        %474 = vmatmul.mubr.f32.gmra.mxu0 %v473
        %v475 = vpop.f32.mrf.mxu0
        %v476 = vadd.f32 %v381, %v475
        %v477 = vpop.f32.mrf.mxu0
        %478 = vmatprep.mubr.f32.mxu0 0.0
        %v479 = vand.u32 %v185, 4294901760
        %v480 = vsub.f32 %v185, %v479
        %481 = vmatmul.mubr.f32.gmra.mxu0 %v480
        %v482 = vpop.f32.mrf.mxu0
        %v483 = vadd.f32 %v387, %v482
        %v484 = vpop.f32.mrf.mxu0
        %485 = vmatprep.mubr.f32.mxu0 0.0
        %v486 = vand.u32 %v188, 4294901760
        %v487 = vsub.f32 %v188, %v486
        %488 = vmatmul.mubr.f32.gmra.mxu0 %v487
        %v489 = vpop.f32.mrf.mxu0
        %v490 = vadd.f32 %v393, %v489
        %v491 = vpop.f32.mrf.mxu0
        %492 = vdwg.mxu0
        %493 = vmatprep.subr.mxu0 0.0
        %494 = vmatpush1.msra.mxu0 0.0
        %495 = vmatprep.subr.mxu0 0.0
        %496 = vmatpush1.msra.mxu0 0.0
        %497 = vmatprep.subr.mxu0 0.0
        %498 = vmatpush1.msra.mxu0 0.0
        %499 = vmatprep.subr.mxu0 0.0
        %500 = vmatpush1.msra.mxu0 0.0
        %501 = vmatprep.subr.mxu0 0.0
        %502 = vmatpush1.msra.mxu0 0.0
        %503 = vmatprep.subr.mxu0 0.0
        %504 = vmatpush1.msra.mxu0 0.0
        %505 = vmatprep.subr.mxu0 0.0
        %506 = vmatpush1.msra.mxu0 0.0
        %507 = vmatprep.subr.mxu0 0.0
        %508 = vmatpush1.msra.mxu0 0.0
        %509 = vmatprep.subr.mxu0 0.0
        %510 = vmatpush1.msra.mxu0 0.0
        %511 = vmatprep.subr.mxu0 0.0
        %512 = vmatpush1.msra.mxu0 0.0
        %513 = vmatprep.subr.mxu0 0.0
        %514 = vmatpush1.msra.mxu0 0.0
        %515 = vmatprep.subr.mxu0 0.0
        %516 = vmatpush1.msra.mxu0 0.0
        %517 = vmatprep.subr.mxu0 0.0
        %518 = vmatpush1.msra.mxu0 0.0
        %519 = vmatprep.subr.mxu0 0.0
        %520 = vmatpush1.msra.mxu0 0.0
        %521 = vmatprep.subr.mxu0 0.0
        %v522 = vand.u32 %v176, 4294901760
        %523 = vmatpush1.msra.mxu0 %v522
        %524 = vmatprep.subr.mxu0 0.0
        %v525 = vand.u32 %v175, 4294901760
        %526 = vmatpush1.msra.mxu0 %v525
        %527 = vmatprep.subr.mxu0 0.0
        %528 = vmatpush2.msra.mxu0 0.0
        %529 = vmatprep.subr.mxu0 0.0
        %530 = vmatpush2.msra.mxu0 0.0
        %531 = vmatprep.subr.mxu0 0.0
        %532 = vmatpush2.msra.mxu0 0.0
        %533 = vmatprep.subr.mxu0 0.0
        %534 = vmatpush2.msra.mxu0 0.0
        %535 = vmatprep.subr.mxu0 0.0
        %536 = vmatpush2.msra.mxu0 0.0
        %537 = vmatprep.subr.mxu0 0.0
        %538 = vmatpush2.msra.mxu0 0.0
        %539 = vmatprep.subr.mxu0 0.0
        %540 = vmatpush2.msra.mxu0 0.0
        %541 = vmatprep.subr.mxu0 0.0
        %542 = vmatpush2.msra.mxu0 0.0
        %543 = vmatprep.subr.mxu0 0.0
        %544 = vmatpush2.msra.mxu0 0.0
        %545 = vmatprep.subr.mxu0 0.0
        %546 = vmatpush2.msra.mxu0 0.0
        %547 = vmatprep.subr.mxu0 0.0
        %548 = vmatpush2.msra.mxu0 0.0
        %549 = vmatprep.subr.mxu0 0.0
        %550 = vmatpush2.msra.mxu0 0.0
        %551 = vmatprep.subr.mxu0 0.0
        %552 = vmatpush2.msra.mxu0 0.0
        %553 = vmatprep.subr.mxu0 0.0
        %554 = vmatpush2.msra.mxu0 0.0
        %555 = vmatprep.subr.mxu0 0.0
        %556 = vmatpush2.msra.mxu0 0.0
        %557 = vmatprep.subr.mxu0 0.0
        %558 = vmatpush2.msra.mxu0 0.0
        %559 = vmatprep.mubr.f32.mxu0 0.0
        %v560 = vand.u32 %v179, 4294901760
        %v561 = vsub.f32 %v179, %v560
        %v562 = vand.u32 %v561, 4294901760
        %563 = vmatmul.mubr.f32.gmra.mxu0 %v562
        %v564 = vpop.f32.mrf.mxu0
        %v565 = vadd.f32 %v469, %v564
        %v566 = vpop.f32.mrf.mxu0
        %567 = vmatprep.mubr.f32.mxu0 0.0
        %v568 = vand.u32 %v182, 4294901760
        %v569 = vsub.f32 %v182, %v568
        %v570 = vand.u32 %v569, 4294901760
        %571 = vmatmul.mubr.f32.gmra.mxu0 %v570
        %v572 = vpop.f32.mrf.mxu0
        %v573 = vadd.f32 %v476, %v572
        %v574 = vpop.f32.mrf.mxu0
        %575 = vmatprep.mubr.f32.mxu0 0.0
        %v576 = vand.u32 %v185, 4294901760
        %v577 = vsub.f32 %v185, %v576
        %v578 = vand.u32 %v577, 4294901760
        %579 = vmatmul.mubr.f32.gmra.mxu0 %v578
        %v580 = vpop.f32.mrf.mxu0
        %v581 = vadd.f32 %v483, %v580
        %v582 = vpop.f32.mrf.mxu0
        %583 = vmatprep.mubr.f32.mxu0 0.0
        %v584 = vand.u32 %v188, 4294901760
        %v585 = vsub.f32 %v188, %v584
        %v586 = vand.u32 %v585, 4294901760
        %587 = vmatmul.mubr.f32.gmra.mxu0 %v586
        %v588 = vpop.f32.mrf.mxu0
        %v589 = vadd.f32 %v490, %v588
        %v590 = vpop.f32.mrf.mxu0
        %591 = vdwg.mxu0
        %592 = vmatprep.subr.mxu0 0.0
        %593 = vmatpush1.msra.mxu0 0.0
        %594 = vmatprep.subr.mxu0 0.0
        %595 = vmatpush1.msra.mxu0 0.0
        %596 = vmatprep.subr.mxu0 0.0
        %597 = vmatpush1.msra.mxu0 0.0
        %598 = vmatprep.subr.mxu0 0.0
        %599 = vmatpush1.msra.mxu0 0.0
        %600 = vmatprep.subr.mxu0 0.0
        %601 = vmatpush1.msra.mxu0 0.0
        %602 = vmatprep.subr.mxu0 0.0
        %603 = vmatpush1.msra.mxu0 0.0
        %604 = vmatprep.subr.mxu0 0.0
        %605 = vmatpush1.msra.mxu0 0.0
        %606 = vmatprep.subr.mxu0 0.0
        %607 = vmatpush1.msra.mxu0 0.0
        %608 = vmatprep.subr.mxu0 0.0
        %609 = vmatpush1.msra.mxu0 0.0
        %610 = vmatprep.subr.mxu0 0.0
        %611 = vmatpush1.msra.mxu0 0.0
        %612 = vmatprep.subr.mxu0 0.0
        %613 = vmatpush1.msra.mxu0 0.0
        %614 = vmatprep.subr.mxu0 0.0
        %615 = vmatpush1.msra.mxu0 0.0
        %616 = vmatprep.subr.mxu0 0.0
        %617 = vmatpush1.msra.mxu0 0.0
        %618 = vmatprep.subr.mxu0 0.0
        %619 = vmatpush1.msra.mxu0 0.0
        %620 = vmatprep.subr.mxu0 0.0
        %v621 = vand.u32 %v176, 4294901760
        %v622 = vsub.f32 %v176, %v621
        %v623 = vand.u32 %v622, 4294901760
        %624 = vmatpush1.msra.mxu0 %v623
        %625 = vmatprep.subr.mxu0 0.0
        %v626 = vand.u32 %v175, 4294901760
        %v627 = vsub.f32 %v175, %v626
        %v628 = vand.u32 %v627, 4294901760
        %629 = vmatpush1.msra.mxu0 %v628
        %630 = vmatprep.subr.mxu0 0.0
        %631 = vmatpush2.msra.mxu0 0.0
        %632 = vmatprep.subr.mxu0 0.0
        %633 = vmatpush2.msra.mxu0 0.0
        %634 = vmatprep.subr.mxu0 0.0
        %635 = vmatpush2.msra.mxu0 0.0
        %636 = vmatprep.subr.mxu0 0.0
        %637 = vmatpush2.msra.mxu0 0.0
        %638 = vmatprep.subr.mxu0 0.0
        %639 = vmatpush2.msra.mxu0 0.0
        %640 = vmatprep.subr.mxu0 0.0
        %641 = vmatpush2.msra.mxu0 0.0
        %642 = vmatprep.subr.mxu0 0.0
        %643 = vmatpush2.msra.mxu0 0.0
        %644 = vmatprep.subr.mxu0 0.0
        %645 = vmatpush2.msra.mxu0 0.0
        %646 = vmatprep.subr.mxu0 0.0
        %647 = vmatpush2.msra.mxu0 0.0
        %648 = vmatprep.subr.mxu0 0.0
        %649 = vmatpush2.msra.mxu0 0.0
        %650 = vmatprep.subr.mxu0 0.0
        %651 = vmatpush2.msra.mxu0 0.0
        %652 = vmatprep.subr.mxu0 0.0
        %653 = vmatpush2.msra.mxu0 0.0
        %654 = vmatprep.subr.mxu0 0.0
        %655 = vmatpush2.msra.mxu0 0.0
        %656 = vmatprep.subr.mxu0 0.0
        %657 = vmatpush2.msra.mxu0 0.0
        %658 = vmatprep.subr.mxu0 0.0
        %659 = vmatpush2.msra.mxu0 0.0
        %660 = vmatprep.subr.mxu0 0.0
        %661 = vmatpush2.msra.mxu0 0.0
        %662 = vmatprep.mubr.f32.mxu0 0.0
        %v663 = vand.u32 %v179, 4294901760
        %664 = vmatmul.mubr.f32.gmra.mxu0 %v663
        %v665 = vpop.f32.mrf.mxu0
        %v666 = vadd.f32 %v565, %v665
        %v667 = vpop.f32.mrf.mxu0
        %668 = vmatprep.mubr.f32.mxu0 0.0
        %v669 = vand.u32 %v182, 4294901760
        %670 = vmatmul.mubr.f32.gmra.mxu0 %v669
        %v671 = vpop.f32.mrf.mxu0
        %v672 = vadd.f32 %v573, %v671
        %v673 = vpop.f32.mrf.mxu0
        %674 = vmatprep.mubr.f32.mxu0 0.0
        %v675 = vand.u32 %v185, 4294901760
        %676 = vmatmul.mubr.f32.gmra.mxu0 %v675
        %v677 = vpop.f32.mrf.mxu0
        %v678 = vadd.f32 %v581, %v677
        %v679 = vpop.f32.mrf.mxu0
        %680 = vmatprep.mubr.f32.mxu0 0.0
        %v681 = vand.u32 %v188, 4294901760
        %682 = vmatmul.mubr.f32.gmra.mxu0 %v681
        %v683 = vpop.f32.mrf.mxu0
        %v684 = vadd.f32 %v589, %v683
        %v685 = vpop.f32.mrf.mxu0
        %686 = vdwg.mxu0
        %687 = vmatprep.subr.mxu0 0.0
        %688 = vmatpush1.msra.mxu0 0.0
        %689 = vmatprep.subr.mxu0 0.0
        %690 = vmatpush1.msra.mxu0 0.0
        %691 = vmatprep.subr.mxu0 0.0
        %692 = vmatpush1.msra.mxu0 0.0
        %693 = vmatprep.subr.mxu0 0.0
        %694 = vmatpush1.msra.mxu0 0.0
        %695 = vmatprep.subr.mxu0 0.0
        %696 = vmatpush1.msra.mxu0 0.0
        %697 = vmatprep.subr.mxu0 0.0
        %698 = vmatpush1.msra.mxu0 0.0
        %699 = vmatprep.subr.mxu0 0.0
        %700 = vmatpush1.msra.mxu0 0.0
        %701 = vmatprep.subr.mxu0 0.0
        %702 = vmatpush1.msra.mxu0 0.0
        %703 = vmatprep.subr.mxu0 0.0
        %704 = vmatpush1.msra.mxu0 0.0
        %705 = vmatprep.subr.mxu0 0.0
        %706 = vmatpush1.msra.mxu0 0.0
        %707 = vmatprep.subr.mxu0 0.0
        %708 = vmatpush1.msra.mxu0 0.0
        %709 = vmatprep.subr.mxu0 0.0
        %710 = vmatpush1.msra.mxu0 0.0
        %711 = vmatprep.subr.mxu0 0.0
        %712 = vmatpush1.msra.mxu0 0.0
        %713 = vmatprep.subr.mxu0 0.0
        %714 = vmatpush1.msra.mxu0 0.0
        %715 = vmatprep.subr.mxu0 0.0
        %v716 = vand.u32 %v176, 4294901760
        %717 = vmatpush1.msra.mxu0 %v716
        %718 = vmatprep.subr.mxu0 0.0
        %v719 = vand.u32 %v175, 4294901760
        %720 = vmatpush1.msra.mxu0 %v719
        %721 = vmatprep.subr.mxu0 0.0
        %722 = vmatpush2.msra.mxu0 0.0
        %723 = vmatprep.subr.mxu0 0.0
        %724 = vmatpush2.msra.mxu0 0.0
        %725 = vmatprep.subr.mxu0 0.0
        %726 = vmatpush2.msra.mxu0 0.0
        %727 = vmatprep.subr.mxu0 0.0
        %728 = vmatpush2.msra.mxu0 0.0
        %729 = vmatprep.subr.mxu0 0.0
        %730 = vmatpush2.msra.mxu0 0.0
        %731 = vmatprep.subr.mxu0 0.0
        %732 = vmatpush2.msra.mxu0 0.0
        %733 = vmatprep.subr.mxu0 0.0
        %734 = vmatpush2.msra.mxu0 0.0
        %735 = vmatprep.subr.mxu0 0.0
        %736 = vmatpush2.msra.mxu0 0.0
        %737 = vmatprep.subr.mxu0 0.0
        %738 = vmatpush2.msra.mxu0 0.0
        %739 = vmatprep.subr.mxu0 0.0
        %740 = vmatpush2.msra.mxu0 0.0
        %741 = vmatprep.subr.mxu0 0.0
        %742 = vmatpush2.msra.mxu0 0.0
        %743 = vmatprep.subr.mxu0 0.0
        %744 = vmatpush2.msra.mxu0 0.0
        %745 = vmatprep.subr.mxu0 0.0
        %746 = vmatpush2.msra.mxu0 0.0
        %747 = vmatprep.subr.mxu0 0.0
        %748 = vmatpush2.msra.mxu0 0.0
        %749 = vmatprep.subr.mxu0 0.0
        %750 = vmatpush2.msra.mxu0 0.0
        %751 = vmatprep.subr.mxu0 0.0
        %752 = vmatpush2.msra.mxu0 0.0
        %753 = vmatprep.mubr.f32.mxu0 0.0
        %v754 = vand.u32 %v179, 4294901760
        %755 = vmatmul.mubr.f32.gmra.mxu0 %v754
        %v756 = vpop.f32.mrf.mxu0
        %v757 = vadd.f32 %v666, %v756
        %v758 = vpop.f32.mrf.mxu0
        %759 = vmatprep.mubr.f32.mxu0 0.0
        %v760 = vand.u32 %v182, 4294901760
        %761 = vmatmul.mubr.f32.gmra.mxu0 %v760
        %v762 = vpop.f32.mrf.mxu0
        %v763 = vadd.f32 %v672, %v762
        %v764 = vpop.f32.mrf.mxu0
        %765 = vmatprep.mubr.f32.mxu0 0.0
        %v766 = vand.u32 %v185, 4294901760
        %767 = vmatmul.mubr.f32.gmra.mxu0 %v766
        %v768 = vpop.f32.mrf.mxu0
        %v769 = vadd.f32 %v678, %v768
        %v770 = vpop.f32.mrf.mxu0
        %771 = vmatprep.mubr.f32.mxu0 0.0
        %v772 = vand.u32 %v188, 4294901760
        %773 = vmatmul.mubr.f32.gmra.mxu0 %v772
        %v774 = vpop.f32.mrf.mxu0
        %v775 = vadd.f32 %v684, %v774
        %v776 = vpop.f32.mrf.mxu0
        %777 = vdwg.mxu0
        %s778 = scalar_lea.vmem %s161, 16 [#allocation5]
        %779 = vst.msk [vmem:[%s778] sm:$0xff] %vm162, %v757
        %780 = vst.msk [vmem:[%s778 + $0x8] sm:$0xff] %vm162, %v763
        %781 = vst.msk [vmem:[%s778 + $0x10] sm:$0xff] %vm162, %v769
        %782 = vst.msk [vmem:[%s778 + $0x18] sm:$0xff] %vm162, %v775
        %s783 = sand.u32 %s74, 1
        %s784 = scalar_lea.sflag [#allocation4], %s783
        %s785 = sand.u32 %s74, 1
        %s786 = smul.addr %s785, 64
        %s787 = scalar_lea.vmem [#allocation5], %s786
        // Predicated region
        $region33: #{tpu_custom_call.1} parent=27 // pred_check
          %p788 = pneg %p84
        $region34: #{tpu_custom_call.1} parent=27 // pred_check_branch
          %790 = sbr.rel (%p788) target = $region36
        $region35: #{tpu_custom_call.1} parent=27 // pred_region
          %s792 = ssub.s32 1024, 1024
          %793 = vsyncadd %s784, %s792
          %s794 = smul.addr %s19, 8
          %s795 = smul.addr %s794, 128
          %s796 = scalar_lea.hbm %s2, %s795
          %s797 = sshll.u32 %s787, 4
          %s798 = int_to_ptr.vmem [resolvable:$true] %s797
          %803 = dma.vmem_to_hbm [thread:$0]  %s798, 1024, %s796, %s784, 128, 128, 8
        $region36: #{tpu_custom_call.1} parent=27 // pred_fallthru
          _
      $region28: #{tpu_custom_call.1} parent=5 // pred_fallthru
        _
      %p804 = scmp.le.s32.totalorder 2, %s14
      // Predicated region
      $region37: #{tpu_custom_call.1} parent=5 // pred_check
        %p805 = pneg %p804
      $region38: #{tpu_custom_call.1} parent=5 // pred_check_branch
        %807 = sbr.rel (%p805) target = $region40
      $region39: #{tpu_custom_call.1} parent=5 // pred_region
        %s808 = ssub.s32 %s14, 2
        // Predicated region
        $region41: #{tpu_custom_call.1} parent=39 // pred_check
          %p809 = pneg %p90
        $region42: #{tpu_custom_call.1} parent=39 // pred_check_branch
          %811 = sbr.rel (%p809) target = $region44
        $region43: #{tpu_custom_call.1} parent=39 // pred_region
          %s812 = sand.u32 %s75, 1
          %s813 = scalar_lea.sflag [#allocation4], %s812
          %s814 = sand.u32 %s75, 1
          %s815 = smul.addr %s814, 64
          %s816 = scalar_lea.vmem [#allocation5], %s815
          %817 = dma.done %s813, 1024
        $region44: #{tpu_custom_call.1} parent=39 // pred_fallthru
          _
      $region40: #{tpu_custom_call.1} parent=5 // pred_fallthru
        _
    $region6: #{tpu_custom_call.1} parent=1 // loop_footer
      %s18 = sadd.s32 1, %s14
    $region7: #{tpu_custom_call.1} parent=1 // loop_footer_branch
      %13 = sbr.rel target = $region3
    $region8: #{tpu_custom_call.1} parent=1 // loop_exit
      _
    %818 = vsyncpa [#allocation3], 1
    %s819 = scalar_lea.sflag [#allocation3], 1
    %820 = vsyncpa %s819, 1
    %821 = vsyncpa [#allocation4], 1
    %s822 = scalar_lea.sflag [#allocation4], 1
    %823 = vsyncpa %s822, 1

</llo_original>
